<compile_context>
chip_gen: v5e
topology: v5e:2x2
jax: 0.10.0
libtpu: 0.0.40
codegen_flags: <defaults>
</compile_context>

<pallas_src>
import jax
import jax.numpy as jnp
from jax.experimental import pallas as pl
from jax.experimental.pallas import tpu as pltpu

LN_EPS = 1e-5  # torch.nn.LayerNorm default


def _round_up(n, m):
    return (n + m - 1) // m * m


def _cdiv(a, b):
    return (a + b - 1) // b


# ---------------------------------------------------------------------------
# Kernel body
# ---------------------------------------------------------------------------
def _lddt_head_kernel(x_ref, w1_ref, b1_ref, w2_ref, b2_ref, w3_ref, b3_ref,
                      o_ref):
    # LayerNorm statistics in f32, single pass (sum and sum-of-squares).
    # gamma/beta are already folded into w1/b1 by prepare_lddt_head_params().
    x = x_ref[...].astype(jnp.float32)
    inv_d = jnp.float32(1.0 / x.shape[-1])
    mean = jnp.sum(x, axis=-1, keepdims=True) * inv_d
    mean_sq = jnp.sum(x * x, axis=-1, keepdims=True) * inv_d
    var = jnp.maximum(mean_sq - mean * mean, 0.0)
    xn = (x - mean) * jax.lax.rsqrt(var + LN_EPS)

    # Linear(dim -> C) + ReLU  (bf16 operands, f32 MXU accumulate).
    h1 = jnp.dot(xn.astype(w1_ref.dtype), w1_ref[...],
                 preferred_element_type=jnp.float32) + b1_ref[...]
    h1 = jnp.maximum(h1, 0.0)

    # Linear(C -> C) + ReLU.
    h2 = jnp.dot(h1.astype(w2_ref.dtype), w2_ref[...],
                 preferred_element_type=jnp.float32) + b2_ref[...]
    h2 = jnp.maximum(h2, 0.0)

    # Linear(C -> buckets, zero-padded to a lane-dense 128-wide output).
    logits = jnp.dot(h2.astype(w3_ref.dtype), w3_ref[...],
                     preferred_element_type=jnp.float32) + b3_ref[...]
    o_ref[...] = logits.astype(o_ref.dtype)


# ---------------------------------------------------------------------------
# One-time parameter preparation (call at parameter-load time, NOT per step)
# ---------------------------------------------------------------------------
def prepare_lddt_head_params(params, *, matmul_dtype=jnp.bfloat16):
    """Fold the LayerNorm affine into W1/b1, pad buckets to 128, cast to bf16.

    Exact algebra:  (xn*g + beta) @ W1 + b1 == xn @ (g[:,None]*W1) + (beta@W1 + b1)
    """
    dim, C = params["w1"].shape
    B = params["w3"].shape[1]

    gamma = params["gamma"].reshape(dim).astype(jnp.float32)
    beta = params["beta"].reshape(dim).astype(jnp.float32)
    w1 = params["w1"].astype(jnp.float32)
    b1 = params["b1"].reshape(1, C).astype(jnp.float32)
    w1_eff = gamma[:, None] * w1
    b1_eff = beta[None, :] @ w1 + b1

    Bp = _round_up(max(B, 128), 128)
    w3 = params["w3"].astype(jnp.float32)
    b3 = params["b3"].reshape(1, B).astype(jnp.float32)
    w3p = jnp.zeros((C, Bp), jnp.float32).at[:, :B].set(w3)
    b3p = jnp.zeros((1, Bp), jnp.float32).at[:, :B].set(b3)

    return dict(
        w1=w1_eff.astype(matmul_dtype), b1=b1_eff,
        w2=params["w2"].astype(matmul_dtype),
        b2=params["b2"].reshape(1, C).astype(jnp.float32),
        w3=w3p.astype(matmul_dtype), b3=b3p,
        dim=dim, channels=C, buckets=B, buckets_padded=Bp,
    )


# ---------------------------------------------------------------------------
# Tiling / VMEM budgeting
# ---------------------------------------------------------------------------
def _vmem_bytes(rt, dim, C, Bp, x_bytes, w_bytes, out_bytes):
    x_buf = 2 * rt * dim * x_bytes            # double-buffered input tile
    out_buf = 2 * rt * Bp * out_bytes         # double-buffered output tile
    weights = 2 * ((dim * C + C * C + C * Bp) * w_bytes + (2 * C + Bp) * 4)
    temps = rt * (2 * dim + 2 * C + Bp) * 4   # f32 x, xn, h1, h2, logits
    return x_buf + out_buf + weights + temps


def _choose_row_tile(T, row_tile, dim, C, Bp, x_bytes, w_bytes, out_bytes,
                     vmem_budget=36 << 20):
    # Enough grid steps that both v7x TensorCores get work, without shrinking
    # the MXU M-tile below ~256 for large T.
    n_steps = _cdiv(T, row_tile)
    if T >= 64:
        n_steps = max(n_steps, min(8, max(2, T // 256)))
    rt = _cdiv(T, n_steps)
    rt = _round_up(rt, 16) if rt >= 16 else _round_up(rt, 8)
    rt = min(rt, _round_up(T, 8))
    # Shrink if the per-step footprint would blow the scoped-VMEM budget
    # (matters for large dim on v5e's 16 MiB / v7x's 32 MiB scoped defaults).
    while rt > 64 and _vmem_bytes(rt, dim, C, Bp, x_bytes, w_bytes,
                                  out_bytes) > vmem_budget:
        rt = max(64, _round_up(rt // 2, 16))
    return rt


# ---------------------------------------------------------------------------
# Wrappers
# ---------------------------------------------------------------------------
def lddt_head_logits(x_tokens, prepared, *, row_tile=512,
                     out_dtype=jnp.float32):
    """x_tokens: [T, dim]. Returns logits [T, buckets_padded] (padded to 128).

    Slice [..., :buckets] in the consumer (ideally fused with the downstream
    softmax / cross-entropy) rather than materializing an extra HBM pass.
    """
    T, dim = x_tokens.shape
    C = prepared["channels"]
    Bp = prepared["buckets_padded"]
    w_dtype = prepared["w1"].dtype

    # bf16 activations into the kernel: halves the dominant HBM read; the
    # kernel recomputes LayerNorm statistics in f32 regardless.
    x_tokens = x_tokens.astype(w_dtype)

    x_bytes = jnp.dtype(w_dtype).itemsize
    w_bytes = jnp.dtype(w_dtype).itemsize
    out_bytes = jnp.dtype(out_dtype).itemsize

    rt = _choose_row_tile(T, row_tile, dim, C, Bp, x_bytes, w_bytes, out_bytes)
    grid = (_cdiv(T, rt),)  # ragged last block: no jnp.pad / extra HBM copy

    vmem_limit = int(min(max(_vmem_bytes(rt, dim, C, Bp, x_bytes, w_bytes,
                                         out_bytes) + (8 << 20), 32 << 20),
                         48 << 20))

    cost = pl.CostEstimate(
        flops=2 * T * (dim * C + C * C + C * Bp),
        transcendentals=T,                                   # rsqrt per token
        bytes_accessed=(T * dim * x_bytes                    # x read (bf16)
                        + T * Bp * out_bytes                 # logits write
                        + (dim * C + C * C + C * Bp) * w_bytes  # weights once
                        + (2 * C + Bp) * 4),                 # biases once
    )

    def full(arr):
        shp = arr.shape
        return pl.BlockSpec(shp, lambda i, _n=len(shp): (0,) * _n)

    out = pl.pallas_call(
        _lddt_head_kernel,
        out_shape=jax.ShapeDtypeStruct((T, Bp), out_dtype),
        grid_spec=pltpu.PrefetchScalarGridSpec(
            num_scalar_prefetch=0,
            grid=grid,
            in_specs=[
                pl.BlockSpec((rt, dim), lambda i: (i, 0)),     # x tile
                full(prepared["w1"]), full(prepared["b1"]),    # fused LN+Lin1
                full(prepared["w2"]), full(prepared["b2"]),    # Linear2
                full(prepared["w3"]), full(prepared["b3"]),    # Linear3 (pad)
            ],
            out_specs=pl.BlockSpec((rt, Bp), lambda i: (i, 0)),
        ),
        compiler_params=pltpu.CompilerParams(
            dimension_semantics=("parallel",),
            vmem_limit_bytes=vmem_limit),
        cost_estimate=cost,
    )(x_tokens, prepared["w1"], prepared["b1"], prepared["w2"],
      prepared["b2"], prepared["w3"], prepared["b3"])
    return out


def lddt_head_forward(headers, representations, prepared, *, row_tile=512,
                      keep_padded=False):
    """Mirrors LDDTHead.forward: returns dict(logits=..., coords=...)."""
    if "folding" in headers and "act" in headers["folding"]:
        x = headers["folding"]["act"]
    else:
        x = representations["single"]
    assert "folding" in headers and "coords" in headers["folding"]

    *lead, dim = x.shape
    T = 1
    for d in lead:
        T *= d
    logits = lddt_head_logits(x.reshape(T, dim), prepared, row_tile=row_tile)
    logits = logits.reshape(*lead, logits.shape[-1])
    if not keep_padded:
        # Hot-path callers should pass keep_padded=True and let the consumer
        # (softmax cross-entropy) fuse the [..., :buckets] gather.
        logits = logits[..., :prepared["buckets"]]
    return dict(logits=logits, coords=headers["folding"]["coords"])


# ---------------------------------------------------------------------------
# Synthetic params + pure-JAX reference (for the self-check)
# ---------------------------------------------------------------------------
def init_lddt_head_params(key, dim, num_channels=None, buckets_num=50):
    """Weights stored as (in_features, out_features): y = x @ W + b."""
    C = num_channels if num_channels is not None else dim
    ks = jax.random.split(key, 8)
    scale = 0.02
    return dict(
        gamma=1.0 + 0.1 * jax.random.normal(ks[6], (1, dim), jnp.float32),
        beta=0.1 * jax.random.normal(ks[7], (1, dim), jnp.float32),
        w1=scale * jax.random.normal(ks[0], (dim, C), jnp.float32),
        b1=scale * jax.random.normal(ks[1], (1, C), jnp.float32),
        w2=scale * jax.random.normal(ks[2], (C, C), jnp.float32),
        b2=scale * jax.random.normal(ks[3], (1, C), jnp.float32),
        w3=scale * jax.random.normal(ks[4], (C, buckets_num), jnp.float32),
        b3=scale * jax.random.normal(ks[5], (1, buckets_num), jnp.float32),
    )


def _reference_forward(x, params):
    """f32 reference of Sequential(LN, Linear, ReLU, Linear, ReLU, Linear)."""
    mean = jnp.mean(x, axis=-1, keepdims=True)
    var = jnp.mean((x - mean) ** 2, axis=-1, keepdims=True)
    xn = (x - mean) / jnp.sqrt(var + LN_EPS)
    xn = xn * params["gamma"][0] + params["beta"][0]
    h = jnp.maximum(xn @ params["w1"] + params["b1"][0], 0.0)
    h = jnp.maximum(h @ params["w2"] + params["b2"][0], 0.0)
    return h @ params["w3"] + params["b3"][0]


if __name__ == "__main__":
    key = jax.random.PRNGKey(0)
    k_x, k_c, k_p = jax.random.split(key, 3)

    batch, seq, dim, buckets = 2, 8, 32, 50
    num_atoms = 14  # coords passthrough only; CA selection happens in loss()

    x = jax.random.normal(k_x, (batch, seq, dim), jnp.float32)
    coords = jax.random.normal(k_c, (batch, seq, num_atoms, 3), jnp.float32)
    params = init_lddt_head_params(k_p, dim, num_channels=dim,
                                   buckets_num=buckets)
    prepared = prepare_lddt_head_params(params)   # once, at load time

    headers = {"folding": {"act": x, "coords": coords}}
    representations = {"single": x}

    out = lddt_head_forward(headers, representations, prepared)
    jax.block_until_ready(out["logits"])

    # correctness check against pure-JAX f32 reference (bf16 activations +
    # bf16 matmul operands in the kernel -> relaxed tolerance)
    ref = _reference_forward(x, params)
    assert out["logits"].shape == (batch, seq, buckets)
    assert out["coords"].shape == coords.shape
    max_err = float(jnp.max(jnp.abs(out["logits"] - ref)))
    assert jnp.allclose(out["logits"], ref, atol=2e-2, rtol=2e-2), max_err

    # TODO(synk): LDDTHead.loss (lddt computation + softmax cross-entropy) is
    # a training-time reduction, not part of the forward pass; not kernelized.
    print("KERNEL_OK")
</pallas_src>

<mosaic_0001>
module attributes {stable_mosaic.version = 11 : i64} {
  func.func @_lddt_head_kernel(%arg0: i32, %arg1: memref<16x32xbf16, #tpu.memory_space<vmem>>, %arg2: memref<32x32xbf16, #tpu.memory_space<vmem>>, %arg3: memref<1x32xf32, #tpu.memory_space<vmem>>, %arg4: memref<32x32xbf16, #tpu.memory_space<vmem>>, %arg5: memref<1x32xf32, #tpu.memory_space<vmem>>, %arg6: memref<32x128xbf16, #tpu.memory_space<vmem>>, %arg7: memref<1x128xf32, #tpu.memory_space<vmem>>, %arg8: memref<16x128xf32, #tpu.memory_space<vmem>>) attributes {dimension_semantics = [#tpu.dimension_semantics<parallel>], iteration_bounds = array<i64: 1>, scalar_prefetch = 0 : i64, scratch_operands = 0 : i64, tpu.core_type = #tpu.core_type<tc>, window_params = [{transform_indices = @transform_0, window_bounds = array<i64: 16, 32>}, {pipeline_mode = #tpu.pipeline_mode<synchronous>, transform_indices = @transform_1, window_bounds = array<i64: 32, 32>}, {pipeline_mode = #tpu.pipeline_mode<synchronous>, transform_indices = @transform_2, window_bounds = array<i64: 1, 32>}, {pipeline_mode = #tpu.pipeline_mode<synchronous>, transform_indices = @transform_3, window_bounds = array<i64: 32, 32>}, {pipeline_mode = #tpu.pipeline_mode<synchronous>, transform_indices = @transform_4, window_bounds = array<i64: 1, 32>}, {pipeline_mode = #tpu.pipeline_mode<synchronous>, transform_indices = @transform_5, window_bounds = array<i64: 32, 128>}, {pipeline_mode = #tpu.pipeline_mode<synchronous>, transform_indices = @transform_6, window_bounds = array<i64: 1, 128>}, {transform_indices = @transform_7, window_bounds = array<i64: 16, 128>}]} {
    %c0 = arith.constant 0 : index
    %c0_0 = arith.constant 0 : index
    %0 = vector.load %arg1[%c0, %c0_0] : memref<16x32xbf16, #tpu.memory_space<vmem>>, vector<16x32xbf16>
    %1 = arith.extf %0 : vector<16x32xbf16> to vector<16x32xf32>
    %cst = arith.constant dense<0.000000e+00> : vector<16xf32>
    %2 = vector.multi_reduction <add>, %1, %cst [1] : vector<16x32xf32> to vector<16xf32>
    %3 = vector.shape_cast %2 : vector<16xf32> to vector<16x1xf32>
    %cst_1 = arith.constant 3.125000e-02 : f32
    %4 = vector.broadcast %cst_1 : f32 to vector<16x1xf32>
    %5 = arith.mulf %3, %4 : vector<16x1xf32>
    %6 = arith.mulf %1, %1 : vector<16x32xf32>
    %cst_2 = arith.constant dense<0.000000e+00> : vector<16xf32>
    %7 = vector.multi_reduction <add>, %6, %cst_2 [1] : vector<16x32xf32> to vector<16xf32>
    %8 = vector.shape_cast %7 : vector<16xf32> to vector<16x1xf32>
    %cst_3 = arith.constant 3.125000e-02 : f32
    %9 = vector.broadcast %cst_3 : f32 to vector<16x1xf32>
    %10 = arith.mulf %8, %9 : vector<16x1xf32>
    %11 = arith.mulf %5, %5 : vector<16x1xf32>
    %12 = arith.subf %10, %11 : vector<16x1xf32>
    %cst_4 = arith.constant 0.000000e+00 : f32
    %13 = vector.broadcast %cst_4 : f32 to vector<16x1xf32>
    %14 = arith.maximumf %12, %13 : vector<16x1xf32>
    %15 = vector.broadcast %5 : vector<16x1xf32> to vector<16x32xf32>
    %16 = arith.subf %1, %15 : vector<16x32xf32>
    %cst_5 = arith.constant 9.99999974E-6 : f32
    %17 = vector.broadcast %cst_5 : f32 to vector<16x1xf32>
    %18 = arith.addf %14, %17 : vector<16x1xf32>
    %19 = math.rsqrt %18 : vector<16x1xf32>
    %20 = vector.broadcast %19 : vector<16x1xf32> to vector<16x32xf32>
    %21 = arith.mulf %16, %20 : vector<16x32xf32>
    %22 = arith.truncf %21 : vector<16x32xf32> to vector<16x32xbf16>
    %c0_6 = arith.constant 0 : index
    %c0_7 = arith.constant 0 : index
    %23 = vector.load %arg2[%c0_6, %c0_7] : memref<32x32xbf16, #tpu.memory_space<vmem>>, vector<32x32xbf16>
    %cst_8 = arith.constant dense<0.000000e+00> : vector<16x32xf32>
    %24 = tpu.matmul %22, %23, %cst_8 {dimension_numbers = #tpu.dot_dimension_numbers<[1], [0], [0], [1], [0, 0, 1, 1], [], []>} : vector<16x32xbf16>, vector<32x32xbf16>, vector<16x32xf32> -> vector<16x32xf32>
    %c0_9 = arith.constant 0 : index
    %c0_10 = arith.constant 0 : index
    %25 = vector.load %arg3[%c0_9, %c0_10] : memref<1x32xf32, #tpu.memory_space<vmem>>, vector<1x32xf32>
    %26 = vector.broadcast %25 : vector<1x32xf32> to vector<16x32xf32>
    %27 = arith.addf %24, %26 : vector<16x32xf32>
    %cst_11 = arith.constant 0.000000e+00 : f32
    %28 = vector.broadcast %cst_11 : f32 to vector<16x32xf32>
    %29 = arith.maximumf %27, %28 : vector<16x32xf32>
    %30 = arith.truncf %29 : vector<16x32xf32> to vector<16x32xbf16>
    %c0_12 = arith.constant 0 : index
    %c0_13 = arith.constant 0 : index
    %31 = vector.load %arg4[%c0_12, %c0_13] : memref<32x32xbf16, #tpu.memory_space<vmem>>, vector<32x32xbf16>
    %cst_14 = arith.constant dense<0.000000e+00> : vector<16x32xf32>
    %32 = tpu.matmul %30, %31, %cst_14 {dimension_numbers = #tpu.dot_dimension_numbers<[1], [0], [0], [1], [0, 0, 1, 1], [], []>} : vector<16x32xbf16>, vector<32x32xbf16>, vector<16x32xf32> -> vector<16x32xf32>
    %c0_15 = arith.constant 0 : index
    %c0_16 = arith.constant 0 : index
    %33 = vector.load %arg5[%c0_15, %c0_16] : memref<1x32xf32, #tpu.memory_space<vmem>>, vector<1x32xf32>
    %34 = vector.broadcast %33 : vector<1x32xf32> to vector<16x32xf32>
    %35 = arith.addf %32, %34 : vector<16x32xf32>
    %cst_17 = arith.constant 0.000000e+00 : f32
    %36 = vector.broadcast %cst_17 : f32 to vector<16x32xf32>
    %37 = arith.maximumf %35, %36 : vector<16x32xf32>
    %38 = arith.truncf %37 : vector<16x32xf32> to vector<16x32xbf16>
    %c0_18 = arith.constant 0 : index
    %c0_19 = arith.constant 0 : index
    %39 = vector.load %arg6[%c0_18, %c0_19] : memref<32x128xbf16, #tpu.memory_space<vmem>>, vector<32x128xbf16>
    %cst_20 = arith.constant dense<0.000000e+00> : vector<16x128xf32>
    %40 = tpu.matmul %38, %39, %cst_20 {dimension_numbers = #tpu.dot_dimension_numbers<[1], [0], [0], [1], [0, 0, 1, 1], [], []>} : vector<16x32xbf16>, vector<32x128xbf16>, vector<16x128xf32> -> vector<16x128xf32>
    %c0_21 = arith.constant 0 : index
    %c0_22 = arith.constant 0 : index
    %41 = vector.load %arg7[%c0_21, %c0_22] : memref<1x128xf32, #tpu.memory_space<vmem>>, vector<1x128xf32>
    %42 = vector.broadcast %41 : vector<1x128xf32> to vector<16x128xf32>
    %43 = arith.addf %40, %42 : vector<16x128xf32>
    %c0_23 = arith.constant 0 : index
    %c0_24 = arith.constant 0 : index
    %44 = vector.load %arg8[%c0_23, %c0_24] : memref<16x128xf32, #tpu.memory_space<vmem>>, vector<16x128xf32>
    tpu.vector_store %arg8[%c0_23, %c0_24], %43 {strides = array<i32>} : memref<16x128xf32, #tpu.memory_space<vmem>>, vector<16x128xf32>,
    return
  }
  func.func @transform_0(%arg0: i32) -> (i32, i32) {
    %c0_i32 = arith.constant 0 : i32
    %c0_i32_0 = arith.constant 0 : i32
    return %arg0, %c0_i32 : i32, i32
  }
  func.func @transform_1(%arg0: i32) -> (i32, i32) {
    %c0_i32 = arith.constant 0 : i32
    %c0_i32_0 = arith.constant 0 : i32
    %c0_i32_1 = arith.constant 0 : i32
    return %c0_i32, %c0_i32_0 : i32, i32
  }
  func.func @transform_2(%arg0: i32) -> (i32, i32) {
    %c0_i32 = arith.constant 0 : i32
    %c0_i32_0 = arith.constant 0 : i32
    %c0_i32_1 = arith.constant 0 : i32
    return %c0_i32, %c0_i32_0 : i32, i32
  }
  func.func @transform_3(%arg0: i32) -> (i32, i32) {
    %c0_i32 = arith.constant 0 : i32
    %c0_i32_0 = arith.constant 0 : i32
    %c0_i32_1 = arith.constant 0 : i32
    return %c0_i32, %c0_i32_0 : i32, i32
  }
  func.func @transform_4(%arg0: i32) -> (i32, i32) {
    %c0_i32 = arith.constant 0 : i32
    %c0_i32_0 = arith.constant 0 : i32
    %c0_i32_1 = arith.constant 0 : i32
    return %c0_i32, %c0_i32_0 : i32, i32
  }
  func.func @transform_5(%arg0: i32) -> (i32, i32) {
    %c0_i32 = arith.constant 0 : i32
    %c0_i32_0 = arith.constant 0 : i32
    %c0_i32_1 = arith.constant 0 : i32
    return %c0_i32, %c0_i32_0 : i32, i32
  }
  func.func @transform_6(%arg0: i32) -> (i32, i32) {
    %c0_i32 = arith.constant 0 : i32
    %c0_i32_0 = arith.constant 0 : i32
    %c0_i32_1 = arith.constant 0 : i32
    return %c0_i32, %c0_i32_0 : i32, i32
  }
  func.func @transform_7(%arg0: i32) -> (i32, i32) {
    %c0_i32 = arith.constant 0 : i32
    %c0_i32_0 = arith.constant 0 : i32
    return %arg0, %c0_i32 : i32, i32
  }
}

</mosaic_0001>

<llo_original>
// kernel: tpu_custom_call.1
$region0: #{tpu_custom_call.1}
  #allocation0 [shape = 'u32[]', space=smem, size = 0x4, offset = 0x4, fixed_abs, tag = 'smem constant byte address 0x4 - core index']
  #allocation1 [shape = 'u32[72,128]{1,0:T(1,128)}', space=vmem, size = 0x9000, scoped, tag = 'internal scratch']
  %s0 = inlined_call_operand.hbm [shape: bf16[16,32], index: 0, kind: input, shape index: {}]
  %s1 = inlined_call_operand.hbm [shape: bf16[32,32], index: 1, kind: input, shape index: {}]
  %s2 = inlined_call_operand.vmem [shape: f32[1,32], index: 2, kind: input, shape index: {}]
  %s3 = inlined_call_operand.hbm [shape: bf16[32,32], index: 3, kind: input, shape index: {}]
  %s4 = inlined_call_operand.vmem [shape: f32[1,32], index: 4, kind: input, shape index: {}]
  %s5 = inlined_call_operand.hbm [shape: bf16[32,128], index: 5, kind: input, shape index: {}]
  %s6 = inlined_call_operand.vmem [shape: f32[1,128], index: 6, kind: input, shape index: {}]
  %s7 = inlined_call_operand.hbm [shape: f32[16,128], index: 7, kind: output, shape index: {}]
  %s8 = sld [smem:[#allocation0]]
  $region54: #{tpu_custom_call.1} parent=0
    _
  %s10 = ssub.s32 1, %s8
  %s11 = scalar_select 0, %s10, %s8
  $region1: #{tpu_custom_call.1} parent=0
    #allocation2 [shape = 'u8[4096]{0}', space=vmem, size = 0x1000, scoped, tag = 'input window, operand 0, single buffered']
    #allocation3 [shape = 's32[1]{0}', space=sflag, size = 0x4, scoped, tag = 'scoped memory for tpu_custom_call.1']
    #allocation4 [shape = 's32[1]{0}', space=sflag, size = 0x4, scoped, tag = 'scoped memory for tpu_custom_call.1']
    #allocation5 [shape = 'u8[8192]{0}', space=vmem, size = 0x2000, scoped, tag = 'input window, operand 1, single buffered']
    #allocation6 [shape = 's32[1]{0}', space=sflag, size = 0x4, scoped, tag = 'scoped memory for tpu_custom_call.1']
    #allocation7 [shape = 'u8[8192]{0}', space=vmem, size = 0x2000, scoped, tag = 'input window, operand 3, single buffered']
    #allocation8 [shape = 'u8[8192]{0}', space=vmem, size = 0x2000, scoped, tag = 'input window, operand 5, single buffered']
    #allocation9 [shape = 's32[1]{0}', space=sflag, size = 0x4, scoped, tag = 'scoped memory for tpu_custom_call.1']
    #allocation10 [shape = 'u8[8192]{0}', space=vmem, size = 0x2000, scoped, tag = 'output window, operand 0, single buffered']
    %12 = vsyncpa [#allocation3], 0
    %13 = vsyncpa [#allocation6], 0
    %14 = vsyncpa [#allocation9], 0
    %15 = vsyncpa [#allocation4], 0
    // Predicated region
    $region2: #{tpu_custom_call.1} parent=1 // pred_check
      _
    $region3: #{tpu_custom_call.1} parent=1 // pred_check_branch
      %17 = sbr.rel (0) target = $region5
    $region4: #{tpu_custom_call.1} parent=1 // pred_region
      %19 = vsyncadd [#allocation3], 0
      %s20 = sshll.u32 %s0, 4
      %s21 = int_to_ptr.hbm [resolvable:$true] %s20
      %s22 = sshll.u32 [#allocation2], 4
      %s23 = int_to_ptr.vmem [resolvable:$true] %s22
      %28 = dma.hbm_to_vmem [thread:$0]  %s21, 128, %s23, [#allocation3], 64, 64, 4
    $region5: #{tpu_custom_call.1} parent=1 // pred_fallthru
      _
    // Predicated region
    $region6: #{tpu_custom_call.1} parent=1 // pred_check
      _
    $region7: #{tpu_custom_call.1} parent=1 // pred_check_branch
      %30 = sbr.rel (0) target = $region9
    $region8: #{tpu_custom_call.1} parent=1 // pred_region
      %32 = vsyncadd [#allocation6], 0
      %s33 = sshll.u32 %s1, 4
      %s34 = int_to_ptr.hbm [resolvable:$true] %s33
      %s35 = sshll.u32 [#allocation5], 4
      %s36 = int_to_ptr.vmem [resolvable:$true] %s35
      %41 = dma.hbm_to_vmem [thread:$0]  %s34, 256, %s36, [#allocation6], 64, 64, 4
    $region9: #{tpu_custom_call.1} parent=1 // pred_fallthru
      _
    // Predicated region
    $region10: #{tpu_custom_call.1} parent=1 // pred_check
      _
    $region11: #{tpu_custom_call.1} parent=1 // pred_check_branch
      %43 = sbr.rel (0) target = $region13
    $region12: #{tpu_custom_call.1} parent=1 // pred_region
      _
    $region13: #{tpu_custom_call.1} parent=1 // pred_fallthru
      _
    // Predicated region
    $region14: #{tpu_custom_call.1} parent=1 // pred_check
      _
    $region15: #{tpu_custom_call.1} parent=1 // pred_check_branch
      %45 = sbr.rel (0) target = $region17
    $region16: #{tpu_custom_call.1} parent=1 // pred_region
      %47 = vsyncadd [#allocation6], 0
      %s48 = sshll.u32 %s3, 4
      %s49 = int_to_ptr.hbm [resolvable:$true] %s48
      %s50 = sshll.u32 [#allocation7], 4
      %s51 = int_to_ptr.vmem [resolvable:$true] %s50
      %56 = dma.hbm_to_vmem [thread:$0]  %s49, 256, %s51, [#allocation6], 64, 64, 4
    $region17: #{tpu_custom_call.1} parent=1 // pred_fallthru
      _
    // Predicated region
    $region18: #{tpu_custom_call.1} parent=1 // pred_check
      _
    $region19: #{tpu_custom_call.1} parent=1 // pred_check_branch
      %58 = sbr.rel (0) target = $region21
    $region20: #{tpu_custom_call.1} parent=1 // pred_region
      _
    $region21: #{tpu_custom_call.1} parent=1 // pred_fallthru
      _
    // Predicated region
    $region22: #{tpu_custom_call.1} parent=1 // pred_check
      _
    $region23: #{tpu_custom_call.1} parent=1 // pred_check_branch
      %60 = sbr.rel (0) target = $region25
    $region24: #{tpu_custom_call.1} parent=1 // pred_region
      %62 = vsyncadd [#allocation9], 0
      %s63 = sshll.u32 %s5, 4
      %s64 = int_to_ptr.hbm [resolvable:$true] %s63
      %s65 = sshll.u32 [#allocation8], 4
      %s66 = int_to_ptr.vmem [resolvable:$true] %s65
      %71 = dma.hbm_to_vmem [thread:$0]  %s64, 256, %s66, [#allocation9], 64, 64, 4
    $region25: #{tpu_custom_call.1} parent=1 // pred_fallthru
      _
    // Predicated region
    $region26: #{tpu_custom_call.1} parent=1 // pred_check
      _
    $region27: #{tpu_custom_call.1} parent=1 // pred_check_branch
      %73 = sbr.rel (0) target = $region29
    $region28: #{tpu_custom_call.1} parent=1 // pred_region
      _
    $region29: #{tpu_custom_call.1} parent=1 // pred_fallthru
      _
    // Predicated region
    $region30: #{tpu_custom_call.1} parent=1 // pred_check
      _
    $region31: #{tpu_custom_call.1} parent=1 // pred_check_branch
      %75 = sbr.rel (0) target = $region33
    $region32: #{tpu_custom_call.1} parent=1 // pred_region
      %77 = dma.done [#allocation3], 128
    $region33: #{tpu_custom_call.1} parent=1 // pred_fallthru
      _
    // Predicated region
    $region34: #{tpu_custom_call.1} parent=1 // pred_check
      _
    $region35: #{tpu_custom_call.1} parent=1 // pred_check_branch
      %79 = sbr.rel (0) target = $region37
    $region36: #{tpu_custom_call.1} parent=1 // pred_region
      %81 = dma.done [#allocation6], 256
    $region37: #{tpu_custom_call.1} parent=1 // pred_fallthru
      _
    // Predicated region
    $region38: #{tpu_custom_call.1} parent=1 // pred_check
      _
    $region39: #{tpu_custom_call.1} parent=1 // pred_check_branch
      %83 = sbr.rel (0) target = $region41
    $region40: #{tpu_custom_call.1} parent=1 // pred_region
      %85 = dma.done [#allocation6], 256
    $region41: #{tpu_custom_call.1} parent=1 // pred_fallthru
      _
    // Predicated region
    $region42: #{tpu_custom_call.1} parent=1 // pred_check
      _
    $region43: #{tpu_custom_call.1} parent=1 // pred_check_branch
      %87 = sbr.rel (0) target = $region45
    $region44: #{tpu_custom_call.1} parent=1 // pred_region
      %89 = dma.done [#allocation9], 256
    $region45: #{tpu_custom_call.1} parent=1 // pred_fallthru
      _
    %v91 = vld [vmem:[#allocation2] sm:$0xf]
    %v92 = vld [vmem:[#allocation2 + $0x4] sm:$0xf]
    %v93 = vunpack.c.l.bf16 %v91
    %v94 = vunpack.c.l.bf16 %v92
    %vm95 = vcmask 261120
    %v96 = vsel %vm95, %v93, 0.0
    %97 = vadd.xlane.f32.xlu0 %v96
    %v98 = vpop.xlane.xlu0 %97
    %v99 = vsel %vm95, %v94, 0.0
    %100 = vadd.xlane.f32.xlu0 %v99
    %v101 = vpop.xlane.xlu0 %100
    %v102 = vmul.f32 %v98, 0.03125
    %v103 = vmul.f32 %v101, 0.03125
    %v104 = vmul.f32 %v93, %v93
    %v105 = vmul.f32 %v94, %v94
    %v106 = vsel %vm95, %v104, 0.0
    %107 = vadd.xlane.f32.xlu0 %v106
    %v108 = vpop.xlane.xlu0 %107
    %v109 = vsel %vm95, %v105, 0.0
    %110 = vadd.xlane.f32.xlu0 %v109
    %v111 = vpop.xlane.xlu0 %110
    %v112 = vmul.f32 %v108, 0.03125
    %v113 = vmul.f32 %v111, 0.03125
    %v114 = vmul.f32 %v102, %v102
    %v115 = vmul.f32 %v103, %v103
    %v116 = vsub.f32 %v112, %v114
    %v117 = vsub.f32 %v113, %v115
    %v118 = vmax.f32 %v116, 0.0
    %v119 = vmax.f32 %v117, 0.0
    %v120 = vsub.f32 %v93, %v102
    %v121 = vsub.f32 %v94, %v103
    %v122 = vadd.f32 %v118, 1e-05
    %v123 = vadd.f32 %v119, 1e-05
    %v124 = vrsqrt.pop %v122
    %v125 = vmul.f32 %v124, %v122
    %v126 = vmul.f32 %v125, %v124
    %v127 = vmul.f32 0.5, %v126
    %v128 = vsub.f32 1.5, %v127
    %v129 = vmul.f32 %v124, %v128
    %vm130 = vweird.f32 %v122
    %vm131 = vweird.f32 %v124
    %vm132 = vmor %vm130, %vm131
    %v133 = vsel %vm132, %v124, %v129
    %v134 = vrsqrt.pop %v123
    %v135 = vmul.f32 %v134, %v123
    %v136 = vmul.f32 %v135, %v134
    %v137 = vmul.f32 0.5, %v136
    %v138 = vsub.f32 1.5, %v137
    %v139 = vmul.f32 %v134, %v138
    %vm140 = vweird.f32 %v123
    %vm141 = vweird.f32 %v134
    %vm142 = vmor %vm140, %vm141
    %v143 = vsel %vm142, %v134, %v139
    %v144 = vmul.f32 %v120, %v133
    %v145 = vmul.f32 %v121, %v143
    %v146 = vpack.c.bf16 %v145, %v144
    %v147 = vld [vmem:[#allocation5] sm:$0xf]
    %v148 = vld [vmem:[#allocation5 + $0x4] sm:$0xf]
    %v149 = vld [vmem:[#allocation5 + $0x8] sm:$0xf]
    %v150 = vld [vmem:[#allocation5 + $0xc] sm:$0xf]
    %v151 = vld [vmem:[%s2] sm:$0x1]
    %v153 = vperm.slane %v151, 0
    %v159 = vunpack.c.l.b16 %v147
    %v160 = vunpack.c.l.b16 %v148
    %v161 = vunpack.c.l.b16 %v149
    %v162 = vunpack.c.l.b16 %v150
    %v163 = vpack.c.b16 %v160, %v159
    %v164 = vpack.c.b16 %v162, %v161
    %v168 = vsel %vm95, %v146, 0
    %170 = vmatpush.bf16.msra.mxu0 0
    %171 = vmatpush.bf16.msra.mxu0 0
    %172 = vmatpush.bf16.msra.mxu0 0
    %173 = vmatpush.bf16.msra.mxu0 0
    %174 = vmatpush.bf16.msra.mxu0 0
    %175 = vmatpush.bf16.msra.mxu0 0
    %176 = vmatpush.bf16.msra.mxu0 %v164
    %177 = vmatpush.bf16.msra.mxu0 %v163
    %178 = vmatmul.bf16.gmra.mxu0 %v168
    %v179 = vpop.f32.mrf.mxu0
    %v180 = vadd.f32 %v153, %v179
    %v181 = vpop.f32.mrf.mxu0
    %v182 = vadd.f32 %v153, %v181
    %183 = vdwg.mxu0
    %v184 = vmax.f32 %v180, 0.0
    %v185 = vmax.f32 %v182, 0.0
    %v186 = vpack.c.bf16 %v185, %v184
    %v187 = vld [vmem:[#allocation7] sm:$0xf]
    %v188 = vld [vmem:[#allocation7 + $0x4] sm:$0xf]
    %v189 = vld [vmem:[#allocation7 + $0x8] sm:$0xf]
    %v190 = vld [vmem:[#allocation7 + $0xc] sm:$0xf]
    %v191 = vld [vmem:[%s4] sm:$0x1]
    %v193 = vperm.slane %v191, 0
    %v199 = vunpack.c.l.b16 %v187
    %v200 = vunpack.c.l.b16 %v188
    %v201 = vunpack.c.l.b16 %v189
    %v202 = vunpack.c.l.b16 %v190
    %v203 = vpack.c.b16 %v200, %v199
    %v204 = vpack.c.b16 %v202, %v201
    %v208 = vsel %vm95, %v186, 0
    %210 = vmatpush.bf16.msra.mxu0 0
    %211 = vmatpush.bf16.msra.mxu0 0
    %212 = vmatpush.bf16.msra.mxu0 0
    %213 = vmatpush.bf16.msra.mxu0 0
    %214 = vmatpush.bf16.msra.mxu0 0
    %215 = vmatpush.bf16.msra.mxu0 0
    %216 = vmatpush.bf16.msra.mxu0 %v204
    %217 = vmatpush.bf16.msra.mxu0 %v203
    %218 = vmatmul.bf16.gmra.mxu0 %v208
    %v219 = vpop.f32.mrf.mxu0
    %v220 = vadd.f32 %v193, %v219
    %v221 = vpop.f32.mrf.mxu0
    %v222 = vadd.f32 %v193, %v221
    %223 = vdwg.mxu0
    %v224 = vmax.f32 %v220, 0.0
    %v225 = vmax.f32 %v222, 0.0
    %v226 = vpack.c.bf16 %v225, %v224
    %v227 = vld [vmem:[#allocation8] sm:$0xf]
    %v228 = vld [vmem:[#allocation8 + $0x4] sm:$0xf]
    %v229 = vld [vmem:[#allocation8 + $0x8] sm:$0xf]
    %v230 = vld [vmem:[#allocation8 + $0xc] sm:$0xf]
    %v231 = vld [vmem:[%s6] sm:$0x1]
    %v233 = vperm.slane %v231, 0
    %v239 = vunpack.c.l.b16 %v227
    %v240 = vunpack.c.l.b16 %v228
    %v241 = vunpack.c.l.b16 %v229
    %v242 = vunpack.c.l.b16 %v230
    %v243 = vpack.c.b16 %v240, %v239
    %v244 = vpack.c.b16 %v242, %v241
    %v248 = vsel %vm95, %v226, 0
    %250 = vmatpush.bf16.msra.mxu0 0
    %251 = vmatpush.bf16.msra.mxu0 0
    %252 = vmatpush.bf16.msra.mxu0 0
    %253 = vmatpush.bf16.msra.mxu0 0
    %254 = vmatpush.bf16.msra.mxu0 0
    %255 = vmatpush.bf16.msra.mxu0 0
    %256 = vmatpush.bf16.msra.mxu0 %v244
    %257 = vmatpush.bf16.msra.mxu0 %v243
    %258 = vmatmul.bf16.gmra.mxu0 %v248
    %v259 = vpop.f32.mrf.mxu0
    %v260 = vadd.f32 %v233, %v259
    %v261 = vpop.f32.mrf.mxu0
    %v262 = vadd.f32 %v233, %v261
    %263 = vdwg.mxu0
    %264 = vst [vmem:[#allocation10] sm:$0xff] %v260
    %265 = vst [vmem:[#allocation10 + $0x8] sm:$0xff] %v262
    // Predicated region
    $region46: #{tpu_custom_call.1} parent=1 // pred_check
      _
    $region47: #{tpu_custom_call.1} parent=1 // pred_check_branch
      %267 = sbr.rel (0) target = $region49
    $region48: #{tpu_custom_call.1} parent=1 // pred_region
      %269 = vsyncadd [#allocation4], 0
      %s270 = sshll.u32 [#allocation10], 4
      %s271 = int_to_ptr.vmem [resolvable:$true] %s270
      %s272 = sshll.u32 %s7, 4
      %s273 = int_to_ptr.hbm [resolvable:$true] %s272
      %278 = dma.vmem_to_hbm [thread:$0]  %s271, 256, %s273, [#allocation4], 128, 128, 8
    $region49: #{tpu_custom_call.1} parent=1 // pred_fallthru
      _
    // Predicated region
    $region50: #{tpu_custom_call.1} parent=1 // pred_check
      _
    $region51: #{tpu_custom_call.1} parent=1 // pred_check_branch
      %280 = sbr.rel (0) target = $region53
    $region52: #{tpu_custom_call.1} parent=1 // pred_region
      %282 = dma.done [#allocation4], 256
    $region53: #{tpu_custom_call.1} parent=1 // pred_fallthru
      _
    %283 = vsyncpa [#allocation3], 1
    %284 = vsyncpa [#allocation6], 1
    %285 = vsyncpa [#allocation9], 1
    %286 = vsyncpa [#allocation4], 1

</llo_original>
